<compile_context>
chip_gen: v6e
topology: v6e:2x2x1
jax: 0.10.0
libtpu: 0.0.40
codegen_flags: <defaults>
</compile_context>

<pallas_src>
import functools

import jax
import jax.numpy as jnp
from jax.experimental import pallas as pl
from jax.experimental.pallas import tpu as pltpu


def _round_up(x, m):
    return ((x + m - 1) // m) * m


def _actor_critic_fused_kernel(x_ref, w1_ref, w23_ref, bias_ref, out_ref, *,
                               action_dim, state_dim):
    cdtype = w1_ref.dtype                        # MXU operand dtype (f32 or bf16)

    xw = x_ref[...]                              # (TB, S+1) f32; lane S = action id (float)
    x = xw.astype(cdtype)                        # action lane hits a zero weight row

    b1 = bias_ref[0:1, :]                        # (1, 2L) f32
    b2 = bias_ref[1:2, :]
    b3 = bias_ref[2:3, :]

    # Fused layer 1: both heads' first Linear + tanh   -> (TB, 2L)
    h1 = jnp.tanh(
        (jnp.dot(x, w1_ref[...], preferred_element_type=jnp.float32) + b1
         ).astype(cdtype))
    # Fused layer 2: block-diagonal second Linear + tanh
    h2 = jnp.tanh(
        (jnp.dot(h1, w23_ref[0], preferred_element_type=jnp.float32) + b2
         ).astype(cdtype))
    # Fused layer 3: lanes [0:A] = actor logits, lane A = state value, rest = 0
    out3 = jnp.dot(h2, w23_ref[1], preferred_element_type=jnp.float32) + b3   # (TB, 2L) f32

    tb, w = out3.shape
    lane = jax.lax.broadcasted_iota(jnp.int32, (tb, w), 1)
    is_act_lane = lane < action_dim

    # Numerically-stable softmax / log-softmax over the actor lanes only (all f32).
    neg_big = jnp.float32(-1e30)                 # finite, so 0 * z never NaNs
    logits = jnp.where(is_act_lane, out3, neg_big)
    m = jnp.max(logits, axis=-1, keepdims=True)
    z = logits - m
    e = jnp.exp(z)                               # padded lanes underflow to exactly 0
    s = jnp.sum(e, axis=-1, keepdims=True)
    log_s = jnp.log(s)

    act = xw[:, state_dim:state_dim + 1].astype(jnp.int32)            # (TB, 1)
    logprob = jnp.sum(jnp.where(lane == act, z, 0.0),
                      axis=-1, keepdims=True) - log_s                 # (TB, 1)
    # Exact entropy: H = log_s - sum(p*z) = log_s - sum(e*z)/s   (e==0 on pad lanes)
    entropy = log_s - jnp.sum(e * z, axis=-1, keepdims=True) / s      # (TB, 1)
    value = jnp.sum(jnp.where(lane == action_dim, out3, 0.0),
                    axis=-1, keepdims=True)                           # (TB, 1)

    # Single combined output block: lane 0 = logprob, 1 = value, 2 = entropy.
    out_lane = jax.lax.broadcasted_iota(jnp.int32, out_ref.shape, 1)
    out_ref[...] = jnp.where(out_lane == 0, logprob,
                   jnp.where(out_lane == 1, value,
                   jnp.where(out_lane == 2, entropy, 0.0)))


@functools.partial(jax.jit, static_argnames=("action_dim", "block_b"))
def actor_critic_evaluate(state, action, packed, *, action_dim, block_b=1024):
    """JAX wrapper reproducing ActorCritic.evaluate(state, action)."""
    B, S = state.shape
    W = packed["w1"].shape[1]                    # 2 * n_latent_var
    assert packed["w1"].shape[0] == S + 1        # extra zero row for the action lane

    # Batch tile: big tiles amortize the ~0.35us/grid-step overhead; aim for >= 2
    # grid steps so the "parallel" axis can shard across both TensorCores on v7x.
    TB = _round_up(min(block_b, max(8, pl.cdiv(B, 2))), 8)
    Bp = _round_up(B, TB)

    # Fold action ids into lane S of the state tile (single input DMA stream).
    # Action ids are small ints -> exact as f32 (and as bf16 inside the kernel).
    x = jnp.concatenate(
        [state.astype(jnp.float32), action.astype(jnp.float32).reshape(B, 1)],
        axis=1)                                                        # (B, S+1)
    if Bp != B:                                   # pad only the tail tile
        x = jnp.concatenate([x, jnp.zeros((Bp - B, S + 1), jnp.float32)], axis=0)

    kernel = functools.partial(_actor_critic_fused_kernel,
                               action_dim=action_dim, state_dim=S)

    out = pl.pallas_call(
        kernel,
        out_shape=jax.ShapeDtypeStruct((Bp, 8), jnp.float32),
        grid=(Bp // TB,),
        in_specs=[
            pl.BlockSpec((TB, S + 1), lambda i: (i, 0)),       # state+action tile (pipelined)
            pl.BlockSpec((S + 1, W), lambda i: (0, 0)),        # fused layer-1 weight (resident)
            pl.BlockSpec((2, W, W), lambda i: (0, 0, 0)),      # stacked layer-2/3 weights
            pl.BlockSpec((3, W), lambda i: (0, 0)),            # packed biases (f32)
        ],
        out_specs=pl.BlockSpec((TB, 8), lambda i: (i, 0)),
        compiler_params=pltpu.CompilerParams(
            dimension_semantics=("parallel",),                 # 2-TC sharding on v7x
            vmem_limit_bytes=32 * 1024 * 1024),                # headroom for large TB on v5e
    )(x, packed["w1"], packed["w23"], packed["biases"])

    return out[:B, 0], out[:B, 1], out[:B, 2]


def init_params(key, state_dim, n_latent_var, action_dim):
    """PyTorch-Linear-style init; weights stored as [in, out]."""
    def linear(k, fan_in, fan_out):
        kw, kb = jax.random.split(k)
        bound = 1.0 / jnp.sqrt(fan_in)
        w = jax.random.uniform(kw, (fan_in, fan_out), jnp.float32, -bound, bound)
        b = jax.random.uniform(kb, (1, fan_out), jnp.float32, -bound, bound)
        return w, b

    keys = jax.random.split(key, 6)
    wa1, ba1 = linear(keys[0], state_dim, n_latent_var)
    wa2, ba2 = linear(keys[1], n_latent_var, n_latent_var)
    wa3, ba3 = linear(keys[2], n_latent_var, action_dim)
    wv1, bv1 = linear(keys[3], state_dim, n_latent_var)
    wv2, bv2 = linear(keys[4], n_latent_var, n_latent_var)
    wv3, bv3 = linear(keys[5], n_latent_var, 1)
    return dict(wa1=wa1, ba1=ba1, wa2=wa2, ba2=ba2, wa3=wa3, ba3=ba3,
                wv1=wv1, bv1=bv1, wv2=wv2, bv2=bv2, wv3=wv3, bv3=bv3)


def pack_params(params, action_dim, dtype=jnp.bfloat16):
    """Fuse actor/value heads into 3 wide matmuls and pack into 3 kernel operands."""
    S, L = params["wa1"].shape
    W = 2 * L
    AP = action_dim + 1
    assert AP <= W, "action_dim + 1 must fit in 2 * n_latent_var"

    w1 = jnp.concatenate([params["wa1"], params["wv1"]], axis=1)        # (S, 2L)
    w1 = jnp.concatenate([w1, jnp.zeros((1, W), jnp.float32)], axis=0)  # (S+1, 2L): action lane row = 0

    w2 = jnp.zeros((W, W), jnp.float32)
    w2 = w2.at[:L, :L].set(params["wa2"]).at[L:, L:].set(params["wv2"])
    w3 = jnp.zeros((W, W), jnp.float32)
    w3 = w3.at[:L, :action_dim].set(params["wa3"])
    w3 = w3.at[L:, action_dim:AP].set(params["wv3"])
    w23 = jnp.stack([w2, w3], axis=0)                                   # (2, 2L, 2L)

    b1 = jnp.concatenate([params["ba1"], params["bv1"]], axis=1)        # (1, 2L)
    b2 = jnp.concatenate([params["ba2"], params["bv2"]], axis=1)        # (1, 2L)
    b3 = jnp.zeros((1, W), jnp.float32)
    b3 = b3.at[:, :action_dim].set(params["ba3"])
    b3 = b3.at[:, action_dim:AP].set(params["bv3"])
    biases = jnp.concatenate([b1, b2, b3], axis=0)                      # (3, 2L) f32

    return {"w1": w1.astype(dtype), "w23": w23.astype(dtype), "biases": biases}


def reference_evaluate(state, action, params):
    """Pure-JAX reference of torch ActorCritic.evaluate for sanity checking."""
    h = jnp.tanh(state @ params["wa1"] + params["ba1"])
    h = jnp.tanh(h @ params["wa2"] + params["ba2"])
    logits = h @ params["wa3"] + params["ba3"]
    logp = jax.nn.log_softmax(logits, axis=-1)
    probs = jnp.exp(logp)
    lp = jnp.take_along_axis(logp, action[:, None], axis=-1)[:, 0]
    ent = -jnp.sum(probs * logp, axis=-1)
    v = jnp.tanh(state @ params["wv1"] + params["bv1"])
    v = jnp.tanh(v @ params["wv2"] + params["bv2"])
    val = (v @ params["wv3"] + params["bv3"])[:, 0]
    return lp, val, ent


# TODO(synk): act() (Categorical sampling + memory appends) and forward() (raises
# NotImplementedError in the torch module) are host-side control flow, not kernelized.

if __name__ == "__main__":
    # small shapes consistent with the module's __init__
    batch, state_dim, n_latent_var, action_dim = 100, 32, 32, 8

    key = jax.random.PRNGKey(0)
    kp, ks, ka = jax.random.split(key, 3)
    params = init_params(kp, state_dim, n_latent_var, action_dim)
    state = jax.random.normal(ks, (batch, state_dim), dtype=jnp.float32)
    action = jax.random.randint(ka, (batch,), 0, action_dim, dtype=jnp.int32)

    ref_lp, ref_val, ref_ent = reference_evaluate(state, action, params)

    # 1) f32 MXU operands, small batch tile -> exercises multi-step grid + tail padding.
    packed_f32 = pack_params(params, action_dim, dtype=jnp.float32)
    lp, val, ent = actor_critic_evaluate(state, action, packed_f32,
                                         action_dim=action_dim, block_b=32)
    jax.block_until_ready((lp, val, ent))
    assert jnp.allclose(lp, ref_lp, atol=1e-4), "logprob mismatch (f32)"
    assert jnp.allclose(val, ref_val, atol=1e-4), "value mismatch (f32)"
    assert jnp.allclose(ent, ref_ent, atol=1e-3), "entropy mismatch (f32)"

    # 2) bf16 MXU operands (default packing; MXU-native on every generation).
    packed_bf16 = pack_params(params, action_dim)
    lp16, val16, ent16 = actor_critic_evaluate(state, action, packed_bf16,
                                               action_dim=action_dim)
    jax.block_until_ready((lp16, val16, ent16))
    assert jnp.allclose(lp16, ref_lp, atol=7.5e-2), "logprob mismatch (bf16)"
    assert jnp.allclose(val16, ref_val, atol=7.5e-2), "value mismatch (bf16)"
    assert jnp.allclose(ent16, ref_ent, atol=7.5e-2), "entropy mismatch (bf16)"

    print("KERNEL_OK")
</pallas_src>

<mosaic_0001>
module attributes {stable_mosaic.version = 11 : i64} {
  func.func @_actor_critic_fused_kernel(%arg0: i32, %arg1: memref<32x33xf32, #tpu.memory_space<vmem>>, %arg2: memref<33x64xf32, #tpu.memory_space<vmem>>, %arg3: memref<2x64x64xf32, #tpu.memory_space<vmem>>, %arg4: memref<3x64xf32, #tpu.memory_space<vmem>>, %arg5: memref<32x8xf32, #tpu.memory_space<vmem>>) attributes {dimension_semantics = [#tpu.dimension_semantics<parallel>], iteration_bounds = array<i64: 4>, scalar_prefetch = 0 : i64, scratch_operands = 0 : i64, tpu.core_type = #tpu.core_type<tc>, window_params = [{transform_indices = @transform_0, window_bounds = array<i64: 32, 33>}, {pipeline_mode = #tpu.pipeline_mode<synchronous>, transform_indices = @transform_1, window_bounds = array<i64: 33, 64>}, {pipeline_mode = #tpu.pipeline_mode<synchronous>, transform_indices = @transform_2, window_bounds = array<i64: 2, 64, 64>}, {pipeline_mode = #tpu.pipeline_mode<synchronous>, transform_indices = @transform_3, window_bounds = array<i64: 3, 64>}, {transform_indices = @transform_4, window_bounds = array<i64: 32, 8>}]} {
    %c0 = arith.constant 0 : index
    %c0_0 = arith.constant 0 : index
    %0 = vector.load %arg1[%c0, %c0_0] : memref<32x33xf32, #tpu.memory_space<vmem>>, vector<32x33xf32>
    %c0_1 = arith.constant 0 : index
    %c0_2 = arith.constant 0 : index
    %1 = vector.load %arg4[%c0_1, %c0_2] : memref<3x64xf32, #tpu.memory_space<vmem>>, vector<1x64xf32>
    %c1 = arith.constant 1 : index
    %c0_3 = arith.constant 0 : index
    %2 = vector.load %arg4[%c1, %c0_3] : memref<3x64xf32, #tpu.memory_space<vmem>>, vector<1x64xf32>
    %c2 = arith.constant 2 : index
    %c0_4 = arith.constant 0 : index
    %3 = vector.load %arg4[%c2, %c0_4] : memref<3x64xf32, #tpu.memory_space<vmem>>, vector<1x64xf32>
    %c0_5 = arith.constant 0 : index
    %c0_6 = arith.constant 0 : index
    %4 = vector.load %arg2[%c0_5, %c0_6] : memref<33x64xf32, #tpu.memory_space<vmem>>, vector<33x64xf32>
    %cst = arith.constant dense<0.000000e+00> : vector<32x64xf32>
    %5 = tpu.matmul %0, %4, %cst {dimension_numbers = #tpu.dot_dimension_numbers<[1], [0], [0], [1], [0, 0, 1, 1], [], []>} : vector<32x33xf32>, vector<33x64xf32>, vector<32x64xf32> -> vector<32x64xf32>
    %6 = vector.broadcast %1 : vector<1x64xf32> to vector<32x64xf32>
    %7 = arith.addf %5, %6 : vector<32x64xf32>
    %8 = math.tanh %7 : vector<32x64xf32>
    %c0_7 = arith.constant 0 : index
    %c0_8 = arith.constant 0 : index
    %c0_9 = arith.constant 0 : index
    %9 = vector.load %arg3[%c0_7, %c0_8, %c0_9] : memref<2x64x64xf32, #tpu.memory_space<vmem>>, vector<1x64x64xf32>
    %10 = vector.shape_cast %9 : vector<1x64x64xf32> to vector<64x64xf32>
    %cst_10 = arith.constant dense<0.000000e+00> : vector<32x64xf32>
    %11 = tpu.matmul %8, %10, %cst_10 {dimension_numbers = #tpu.dot_dimension_numbers<[1], [0], [0], [1], [0, 0, 1, 1], [], []>} : vector<32x64xf32>, vector<64x64xf32>, vector<32x64xf32> -> vector<32x64xf32>
    %12 = vector.broadcast %2 : vector<1x64xf32> to vector<32x64xf32>
    %13 = arith.addf %11, %12 : vector<32x64xf32>
    %14 = math.tanh %13 : vector<32x64xf32>
    %c1_11 = arith.constant 1 : index
    %c0_12 = arith.constant 0 : index
    %c0_13 = arith.constant 0 : index
    %15 = vector.load %arg3[%c1_11, %c0_12, %c0_13] : memref<2x64x64xf32, #tpu.memory_space<vmem>>, vector<1x64x64xf32>
    %16 = vector.shape_cast %15 : vector<1x64x64xf32> to vector<64x64xf32>
    %cst_14 = arith.constant dense<0.000000e+00> : vector<32x64xf32>
    %17 = tpu.matmul %14, %16, %cst_14 {dimension_numbers = #tpu.dot_dimension_numbers<[1], [0], [0], [1], [0, 0, 1, 1], [], []>} : vector<32x64xf32>, vector<64x64xf32>, vector<32x64xf32> -> vector<32x64xf32>
    %18 = vector.broadcast %3 : vector<1x64xf32> to vector<32x64xf32>
    %19 = arith.addf %17, %18 : vector<32x64xf32>
    %20 = tpu.iota {dimensions = array<i32: 1>} : vector<32x64xi32>
    %c8_i32 = arith.constant 8 : i32
    %21 = vector.broadcast %c8_i32 : i32 to vector<32x64xi32>
    %22 = arith.cmpi slt, %20, %21 : vector<32x64xi32>
    %cst_15 = arith.constant -1.000000e+30 : f32
    %23 = vector.broadcast %cst_15 : f32 to vector<32x64xf32>
    %24 = arith.select %22, %19, %23 : vector<32x64xi1>, vector<32x64xf32>
    %cst_16 = arith.constant dense<0xFF800000> : vector<32xf32>
    %25 = vector.multi_reduction <maximumf>, %24, %cst_16 [1] : vector<32x64xf32> to vector<32xf32>
    %26 = vector.shape_cast %25 : vector<32xf32> to vector<32x1xf32>
    %27 = vector.broadcast %26 : vector<32x1xf32> to vector<32x64xf32>
    %28 = arith.subf %24, %27 : vector<32x64xf32>
    %29 = math.exp %28 : vector<32x64xf32>
    %cst_17 = arith.constant dense<0.000000e+00> : vector<32xf32>
    %30 = vector.multi_reduction <add>, %29, %cst_17 [1] : vector<32x64xf32> to vector<32xf32>
    %31 = vector.shape_cast %30 : vector<32xf32> to vector<32x1xf32>
    %32 = math.log %31 : vector<32x1xf32>
    %33 = vector.extract_strided_slice %0 {offsets = [0, 32], sizes = [32, 1], strides = [1, 1]} : vector<32x33xf32> to vector<32x1xf32>
    %34 = arith.fptosi %33 : vector<32x1xf32> to vector<32x1xi32>
    %35 = vector.broadcast %34 : vector<32x1xi32> to vector<32x64xi32>
    %36 = arith.cmpi eq, %20, %35 : vector<32x64xi32>
    %cst_18 = arith.constant 0.000000e+00 : f32
    %37 = vector.broadcast %cst_18 : f32 to vector<32x64xf32>
    %38 = arith.select %36, %28, %37 : vector<32x64xi1>, vector<32x64xf32>
    %cst_19 = arith.constant dense<0.000000e+00> : vector<32xf32>
    %39 = vector.multi_reduction <add>, %38, %cst_19 [1] : vector<32x64xf32> to vector<32xf32>
    %40 = vector.shape_cast %39 : vector<32xf32> to vector<32x1xf32>
    %41 = arith.subf %40, %32 : vector<32x1xf32>
    %42 = arith.mulf %29, %28 : vector<32x64xf32>
    %cst_20 = arith.constant dense<0.000000e+00> : vector<32xf32>
    %43 = vector.multi_reduction <add>, %42, %cst_20 [1] : vector<32x64xf32> to vector<32xf32>
    %44 = vector.shape_cast %43 : vector<32xf32> to vector<32x1xf32>
    %45 = arith.divf %44, %31 : vector<32x1xf32>
    %46 = arith.subf %32, %45 : vector<32x1xf32>
    %c8_i32_21 = arith.constant 8 : i32
    %47 = vector.broadcast %c8_i32_21 : i32 to vector<32x64xi32>
    %48 = arith.cmpi eq, %20, %47 : vector<32x64xi32>
    %cst_22 = arith.constant 0.000000e+00 : f32
    %49 = vector.broadcast %cst_22 : f32 to vector<32x64xf32>
    %50 = arith.select %48, %19, %49 : vector<32x64xi1>, vector<32x64xf32>
    %cst_23 = arith.constant dense<0.000000e+00> : vector<32xf32>
    %51 = vector.multi_reduction <add>, %50, %cst_23 [1] : vector<32x64xf32> to vector<32xf32>
    %52 = vector.shape_cast %51 : vector<32xf32> to vector<32x1xf32>
    %53 = tpu.iota {dimensions = array<i32: 1>} : vector<32x8xi32>
    %c0_i32 = arith.constant 0 : i32
    %54 = vector.broadcast %c0_i32 : i32 to vector<32x8xi32>
    %55 = arith.cmpi eq, %53, %54 : vector<32x8xi32>
    %c1_i32 = arith.constant 1 : i32
    %56 = vector.broadcast %c1_i32 : i32 to vector<32x8xi32>
    %57 = arith.cmpi eq, %53, %56 : vector<32x8xi32>
    %c2_i32 = arith.constant 2 : i32
    %58 = vector.broadcast %c2_i32 : i32 to vector<32x8xi32>
    %59 = arith.cmpi eq, %53, %58 : vector<32x8xi32>
    %cst_24 = arith.constant 0.000000e+00 : f32
    %60 = vector.shape_cast %46 : vector<32x1xf32> to vector<32x1xf32>
    %61 = vector.broadcast %60 : vector<32x1xf32> to vector<32x8xf32>
    %62 = vector.broadcast %cst_24 : f32 to vector<32x8xf32>
    %63 = arith.select %59, %61, %62 : vector<32x8xi1>, vector<32x8xf32>
    %64 = vector.shape_cast %52 : vector<32x1xf32> to vector<32x1xf32>
    %65 = vector.broadcast %64 : vector<32x1xf32> to vector<32x8xf32>
    %66 = arith.select %57, %65, %63 : vector<32x8xi1>, vector<32x8xf32>
    %67 = vector.shape_cast %41 : vector<32x1xf32> to vector<32x1xf32>
    %68 = vector.broadcast %67 : vector<32x1xf32> to vector<32x8xf32>
    %69 = arith.select %55, %68, %66 : vector<32x8xi1>, vector<32x8xf32>
    %c0_25 = arith.constant 0 : index
    %c0_26 = arith.constant 0 : index
    %70 = vector.load %arg5[%c0_25, %c0_26] : memref<32x8xf32, #tpu.memory_space<vmem>>, vector<32x8xf32>
    tpu.vector_store %arg5[%c0_25, %c0_26], %69 {strides = array<i32>} : memref<32x8xf32, #tpu.memory_space<vmem>>, vector<32x8xf32>,
    return
  }
  func.func @transform_0(%arg0: i32) -> (i32, i32) {
    %c0_i32 = arith.constant 0 : i32
    %c0_i32_0 = arith.constant 0 : i32
    return %arg0, %c0_i32 : i32, i32
  }
  func.func @transform_1(%arg0: i32) -> (i32, i32) {
    %c0_i32 = arith.constant 0 : i32
    %c0_i32_0 = arith.constant 0 : i32
    %c0_i32_1 = arith.constant 0 : i32
    return %c0_i32, %c0_i32_0 : i32, i32
  }
  func.func @transform_2(%arg0: i32) -> (i32, i32, i32) {
    %c0_i32 = arith.constant 0 : i32
    %c0_i32_0 = arith.constant 0 : i32
    %c0_i32_1 = arith.constant 0 : i32
    %c0_i32_2 = arith.constant 0 : i32
    return %c0_i32, %c0_i32_0, %c0_i32_1 : i32, i32, i32
  }
  func.func @transform_3(%arg0: i32) -> (i32, i32) {
    %c0_i32 = arith.constant 0 : i32
    %c0_i32_0 = arith.constant 0 : i32
    %c0_i32_1 = arith.constant 0 : i32
    return %c0_i32, %c0_i32_0 : i32, i32
  }
  func.func @transform_4(%arg0: i32) -> (i32, i32) {
    %c0_i32 = arith.constant 0 : i32
    %c0_i32_0 = arith.constant 0 : i32
    return %arg0, %c0_i32 : i32, i32
  }
}

</mosaic_0001>

<llo_original>
// kernel: actor_critic_evaluate.1
$region0: #{actor_critic_evaluate.1}
  #allocation0 [shape = 'u32[]', space=smem, size = 0x4, offset = 0x4, fixed_abs, tag = 'smem constant byte address 0x4 - core index']
  #allocation1 [shape = 'u32[144,128]{1,0:T(1,128)}', space=vmem, size = 0x12000, scoped, tag = 'internal scratch']
  %s0 = inlined_call_operand.vmem [shape: f32[128,33], index: 0, kind: input, shape index: {}]
  %s1 = inlined_call_operand.vmem [shape: f32[33,64], index: 1, kind: input, shape index: {}]
  %s2 = inlined_call_operand.vmem [shape: f32[2,64,64], index: 2, kind: input, shape index: {}]
  %s3 = inlined_call_operand.vmem [shape: f32[3,64], index: 3, kind: input, shape index: {}]
  %s4 = inlined_call_operand.vmem [shape: f32[128,8], index: 4, kind: output, shape index: {}]
  %s5 = sld [smem:[#allocation0]]
  $region49: #{actor_critic_evaluate.1} parent=0
    _
  %s7 = ssub.s32 1, %s5
  %s8 = scalar_select 0, %s7, %s5
  loop: start=0, step=1, limit=6
  $region2: #{actor_critic_evaluate.1} parent=0 // loop_pre_header
    _
  $region3: #{actor_critic_evaluate.1} parent=0 // loop_header
    %s10 = sphi 0, %s14
    %p11 = scmp.ge.s32.totalorder %s10, 6
    %s20 = sphi 0, %s22
    %s23 = sphi 0, %s20
    %s24 = sphi 0, %s23
    %s40 = sphi 0, %s24
    %s44 = sphi 0, %s44
    %s46 = sphi 0, %s44
    %s47 = sphi 0, %s46
    %s61 = sphi 0, %s47
    %s65 = sphi 0, %s65
    %s67 = sphi 0, %s65
    %s68 = sphi 0, %s67
    %s82 = sphi 0, %s68
    %s86 = sphi 0, %s86
    %s88 = sphi 0, %s86
    %s89 = sphi 0, %s88
    %s103 = sphi 0, %s89
    %s109 = sphi 0, %s111
    %s112 = sphi 0, %s109
    %s113 = sphi 0, %s112
    %s129 = sphi 0, %s113
  $region4: #{actor_critic_evaluate.1} parent=0 // loop_header_branch
    %13 = sbr.rel (%p11) target = $region8
  $region5: #{actor_critic_evaluate.1} parent=0 // loop_body
    %s15 = ssub.s32 %s10, 1
    %s16 = ssub.s32 %s10, 2
    %s17 = sadd.s32 %s10, 1
    %s18 = ssub.s32 %s10, %s17
    %p19 = scmp.eq.s32.totalorder %s18, 0
    %s21 = sadd.s32 %s20, 1
    %s22 = scalar_select %p19, %s20, %s21
    %p25 = pneg %p19
    %p26 = scmp.eq.s32.totalorder %s10, 3
    %p27 = por %p25, %p26
    %p28 = scmp.ne.s32.totalorder %s20, %s23
    %p29 = scmp.eq.s32.totalorder %s10, 0
    %p30 = por %p28, %p29
    %p31 = scmp.ne.s32.totalorder %s20, %s23
    %p32 = scmp.eq.s32.totalorder %s15, 3
    %p33 = por %p31, %p32
    %p34 = scmp.ne.s32.totalorder %s23, %s24
    %p35 = scmp.eq.s32.totalorder %s15, 0
    %p36 = por %p34, %p35
    %p37 = scmp.ne.s32.totalorder %s23, %s24
    %p38 = scmp.eq.s32.totalorder %s16, 3
    %p39 = por %p37, %p38
    %p41 = scmp.ne.s32.totalorder %s24, %s40
    %p42 = scmp.eq.s32.totalorder %s16, 0
    %p43 = por %p41, %p42
    %s45 = sadd.s32 %s44, 1
    %p48 = scmp.eq.s32.totalorder %s10, 3
    %p49 = scmp.ne.s32.totalorder %s44, %s46
    %p50 = scmp.eq.s32.totalorder %s10, 0
    %p51 = por %p49, %p50
    %p52 = scmp.ne.s32.totalorder %s44, %s46
    %p53 = scmp.eq.s32.totalorder %s15, 3
    %p54 = por %p52, %p53
    %p55 = scmp.ne.s32.totalorder %s46, %s47
    %p56 = scmp.eq.s32.totalorder %s15, 0
    %p57 = por %p55, %p56
    %p58 = scmp.ne.s32.totalorder %s46, %s47
    %p59 = scmp.eq.s32.totalorder %s16, 3
    %p60 = por %p58, %p59
    %p62 = scmp.ne.s32.totalorder %s47, %s61
    %p63 = scmp.eq.s32.totalorder %s16, 0
    %p64 = por %p62, %p63
    %s66 = sadd.s32 %s65, 1
    %p69 = scmp.eq.s32.totalorder %s10, 3
    %p70 = scmp.ne.s32.totalorder %s65, %s67
    %p71 = scmp.eq.s32.totalorder %s10, 0
    %p72 = por %p70, %p71
    %p73 = scmp.ne.s32.totalorder %s65, %s67
    %p74 = scmp.eq.s32.totalorder %s15, 3
    %p75 = por %p73, %p74
    %p76 = scmp.ne.s32.totalorder %s67, %s68
    %p77 = scmp.eq.s32.totalorder %s15, 0
    %p78 = por %p76, %p77
    %p79 = scmp.ne.s32.totalorder %s67, %s68
    %p80 = scmp.eq.s32.totalorder %s16, 3
    %p81 = por %p79, %p80
    %p83 = scmp.ne.s32.totalorder %s68, %s82
    %p84 = scmp.eq.s32.totalorder %s16, 0
    %p85 = por %p83, %p84
    %s87 = sadd.s32 %s86, 1
    %p90 = scmp.eq.s32.totalorder %s10, 3
    %p91 = scmp.ne.s32.totalorder %s86, %s88
    %p92 = scmp.eq.s32.totalorder %s10, 0
    %p93 = por %p91, %p92
    %p94 = scmp.ne.s32.totalorder %s86, %s88
    %p95 = scmp.eq.s32.totalorder %s15, 3
    %p96 = por %p94, %p95
    %p97 = scmp.ne.s32.totalorder %s88, %s89
    %p98 = scmp.eq.s32.totalorder %s15, 0
    %p99 = por %p97, %p98
    %p100 = scmp.ne.s32.totalorder %s88, %s89
    %p101 = scmp.eq.s32.totalorder %s16, 3
    %p102 = por %p100, %p101
    %p104 = scmp.ne.s32.totalorder %s89, %s103
    %p105 = scmp.eq.s32.totalorder %s16, 0
    %p106 = por %p104, %p105
    %s107 = ssub.s32 %s10, %s17
    %p108 = scmp.eq.s32.totalorder %s107, 0
    %s110 = sadd.s32 %s109, 1
    %s111 = scalar_select %p108, %s109, %s110
    %p114 = pneg %p108
    %p115 = scmp.eq.s32.totalorder %s10, 3
    %p116 = por %p114, %p115
    %p117 = scmp.ne.s32.totalorder %s109, %s112
    %p118 = scmp.eq.s32.totalorder %s10, 0
    %p119 = por %p117, %p118
    %p120 = scmp.ne.s32.totalorder %s109, %s112
    %p121 = scmp.eq.s32.totalorder %s15, 3
    %p122 = por %p120, %p121
    %p123 = scmp.ne.s32.totalorder %s112, %s113
    %p124 = scmp.eq.s32.totalorder %s15, 0
    %p125 = por %p123, %p124
    %p126 = scmp.ne.s32.totalorder %s112, %s113
    %p127 = scmp.eq.s32.totalorder %s16, 3
    %p128 = por %p126, %p127
    %p130 = scmp.ne.s32.totalorder %s113, %s129
    %p131 = scmp.eq.s32.totalorder %s16, 0
    %p132 = por %p130, %p131
    %p133 = scmp.le.s32.totalorder 1, %s10
    %p134 = scmp.lt.s32.totalorder %s10, 5
    %p135 = pnand %p133, %p134
    %p136 = pneg %p135
    // Predicated region
    $region9: #{actor_critic_evaluate.1} parent=5 // pred_check
      _
    $region10: #{actor_critic_evaluate.1} parent=5 // pred_check_branch
      %138 = sbr.rel (%p135) target = $region12
    $region11: #{actor_critic_evaluate.1} parent=5 // pred_region
      %s139 = ssub.s32 %s10, 1
      // Predicated region
      $region13: #{actor_critic_evaluate.1} parent=11 // pred_check
        %p140 = pneg %p57
      $region14: #{actor_critic_evaluate.1} parent=11 // pred_check_branch
        %142 = sbr.rel (%p140) target = $region16
      $region15: #{actor_critic_evaluate.1} parent=11 // pred_region
        _
      $region16: #{actor_critic_evaluate.1} parent=11 // pred_fallthru
        _
      // Predicated region
      $region17: #{actor_critic_evaluate.1} parent=11 // pred_check
        %p143 = pneg %p78
      $region18: #{actor_critic_evaluate.1} parent=11 // pred_check_branch
        %145 = sbr.rel (%p143) target = $region20
      $region19: #{actor_critic_evaluate.1} parent=11 // pred_region
        _
      $region20: #{actor_critic_evaluate.1} parent=11 // pred_fallthru
        _
      // Predicated region
      $region21: #{actor_critic_evaluate.1} parent=11 // pred_check
        %p146 = pneg %p99
      $region22: #{actor_critic_evaluate.1} parent=11 // pred_check_branch
        %148 = sbr.rel (%p146) target = $region24
      $region23: #{actor_critic_evaluate.1} parent=11 // pred_region
        _
      $region24: #{actor_critic_evaluate.1} parent=11 // pred_fallthru
        _
    $region12: #{actor_critic_evaluate.1} parent=5 // pred_fallthru
      _
    %p149 = scmp.lt.s32.totalorder %s10, 4
    // Predicated region
    $region25: #{actor_critic_evaluate.1} parent=5 // pred_check
      %p150 = pneg %p149
    $region26: #{actor_critic_evaluate.1} parent=5 // pred_check_branch
      %152 = sbr.rel (%p150) target = $region28
    $region27: #{actor_critic_evaluate.1} parent=5 // pred_region
      // Predicated region
      $region29: #{actor_critic_evaluate.1} parent=27 // pred_check
        %p153 = pneg %p30
      $region30: #{actor_critic_evaluate.1} parent=27 // pred_check_branch
        %155 = sbr.rel (%p153) target = $region32
      $region31: #{actor_critic_evaluate.1} parent=27 // pred_region
        %s156 = smul.u32 4, %s10
        %p157 = scmp.lt.s32.totalorder %s156, 15
        %s158 = scalar_select %p157, %s156, 15
        %s159 = smul.addr %s158, 8
        %s160 = scalar_lea.vmem %s0, %s159
        %s161 = smul.u32 4, %s10
      $region32: #{actor_critic_evaluate.1} parent=27 // pred_fallthru
        _
    $region28: #{actor_critic_evaluate.1} parent=5 // pred_fallthru
      _
    %p162 = scmp.le.s32.totalorder 1, %s10
    %p163 = scmp.lt.s32.totalorder %s10, 5
    %p164 = pnand %p162, %p163
    %p165 = pneg %p164
    // Predicated region
    $region33: #{actor_critic_evaluate.1} parent=5 // pred_check
      _
    $region34: #{actor_critic_evaluate.1} parent=5 // pred_check_branch
      %167 = sbr.rel (%p164) target = $region36
    $region35: #{actor_critic_evaluate.1} parent=5 // pred_region
      %s168 = ssub.s32 %s10, 1
      %s169 = smul.u32 4, %s15
      %p170 = scmp.lt.s32.totalorder %s169, 15
      %s171 = scalar_select %p170, %s169, 15
      %s172 = smul.addr %s171, 8
      %s173 = scalar_lea.vmem %s0, %s172
      %p174 = pneg %p36
      %p175 = pneg %p33
      %p176 = pneg %p57
      %p177 = pneg %p54
      %p178 = pneg %p78
      %p179 = pneg %p75
      %p180 = pneg %p99
      %p181 = pneg %p96
      %p182 = pneg %p125
      %p183 = pneg %p122
      %s184 = smul.u32 4, %s15
      %p185 = scmp.lt.s32.totalorder %s184, 15
      %s186 = scalar_select %p185, %s184, 15
      %s187 = smul.addr %s186, 8
      %s188 = scalar_lea.vmem %s4, %s187
      %s189 = smul.u32 4, %s15
      %p190 = scmp.lt.s32.totalorder %s189, 15
      %s191 = scalar_select %p190, %s189, 15
      %s192 = smul.addr %s191, 8
      %s193 = scalar_lea.vmem %s0, %s192
      %s194 = smul.u32 4, %s15
      %s195 = smul.u32 4, %s15
      %p196 = scmp.lt.s32.totalorder %s195, 15
      %s197 = scalar_select %p196, %s195, 15
      %s198 = smul.addr %s197, 8
      %s199 = scalar_lea.vmem %s4, %s198
      %s200 = smul.u32 4, %s15
      %v201 = vld [vmem:[%s193] sm:$0xff]
      %v202 = vld [vmem:[%s193 + $0x8] sm:$0xff]
      %v203 = vld [vmem:[%s193 + $0x10] sm:$0xff]
      %v204 = vld [vmem:[%s193 + $0x18] sm:$0xff]
      %v205 = vld [vmem:[%s3] sm:$0x1]
      %v206 = vld [vmem:[%s3 + $0x1] sm:$0x1]
      %v207 = vld [vmem:[%s3 + $0x2] sm:$0x1]
      %v208 = vld [vmem:[%s1] sm:$0xff]
      %v209 = vld [vmem:[%s1 + $0x8] sm:$0xff]
      %v210 = vld [vmem:[%s1 + $0x10] sm:$0xff]
      %v211 = vld [vmem:[%s1 + $0x18] sm:$0xff]
      %v212 = vld [vmem:[%s1 + $0x20] sm:$0x1]
      %v213 = vlaneseq
      %v214 = vshrl.u32 %v213, 7
      %v215 = vsub.s32 0, %v214
      %v216 = vrot.slane %v205, %v215
      %vm217 = vcmask 269312
      %v219 = vsel %vm217, %v201, 0
      %v222 = vsel %vm217, %v202, 0
      %v225 = vsel %vm217, %v203, 0
      %v228 = vsel %vm217, %v204, 0
      %vm230 = vcmask 1040384
      %v232 = vsel %vm230, %v212, 0
      %234 = vmatprep.subr.mxu0 0.0
      %235 = vmatpush1.msra.mxu0 0.0
      %236 = vmatprep.subr.mxu0 0.0
      %237 = vmatpush1.msra.mxu0 0.0
      %238 = vmatprep.subr.mxu0 0.0
      %239 = vmatpush1.msra.mxu0 0.0
      %240 = vmatprep.subr.mxu0 0.0
      %241 = vmatpush1.msra.mxu0 0.0
      %242 = vmatprep.subr.mxu0 0.0
      %243 = vmatpush1.msra.mxu0 0.0
      %244 = vmatprep.subr.mxu0 0.0
      %245 = vmatpush1.msra.mxu0 0.0
      %246 = vmatprep.subr.mxu0 0.0
      %247 = vmatpush1.msra.mxu0 0.0
      %248 = vmatprep.subr.mxu0 0.0
      %249 = vmatpush1.msra.mxu0 0.0
      %250 = vmatprep.subr.mxu0 0.0
      %251 = vmatpush1.msra.mxu0 0.0
      %252 = vmatprep.subr.mxu0 0.0
      %253 = vmatpush1.msra.mxu0 0.0
      %254 = vmatprep.subr.mxu0 0.0
      %255 = vmatpush1.msra.mxu0 0.0
      %256 = vmatprep.subr.mxu0 0.0
      %257 = vmatpush1.msra.mxu0 %v232
      %258 = vmatprep.subr.mxu0 0.0
      %259 = vmatpush1.msra.mxu0 %v211
      %260 = vmatprep.subr.mxu0 0.0
      %261 = vmatpush1.msra.mxu0 %v210
      %262 = vmatprep.subr.mxu0 0.0
      %263 = vmatpush1.msra.mxu0 %v209
      %264 = vmatprep.subr.mxu0 0.0
      %265 = vmatpush1.msra.mxu0 %v208
      %266 = vmatprep.subr.mxu0 0.0
      %267 = vmatpush2.msra.mxu0 0.0
      %268 = vmatprep.subr.mxu0 0.0
      %269 = vmatpush2.msra.mxu0 0.0
      %270 = vmatprep.subr.mxu0 0.0
      %271 = vmatpush2.msra.mxu0 0.0
      %272 = vmatprep.subr.mxu0 0.0
      %273 = vmatpush2.msra.mxu0 0.0
      %274 = vmatprep.subr.mxu0 0.0
      %275 = vmatpush2.msra.mxu0 0.0
      %276 = vmatprep.subr.mxu0 0.0
      %277 = vmatpush2.msra.mxu0 0.0
      %278 = vmatprep.subr.mxu0 0.0
      %279 = vmatpush2.msra.mxu0 0.0
      %280 = vmatprep.subr.mxu0 0.0
      %281 = vmatpush2.msra.mxu0 0.0
      %282 = vmatprep.subr.mxu0 0.0
      %283 = vmatpush2.msra.mxu0 0.0
      %284 = vmatprep.subr.mxu0 0.0
      %285 = vmatpush2.msra.mxu0 0.0
      %286 = vmatprep.subr.mxu0 0.0
      %287 = vmatpush2.msra.mxu0 0.0
      %288 = vmatprep.subr.mxu0 0.0
      %289 = vmatpush2.msra.mxu0 0.0
      %290 = vmatprep.subr.mxu0 0.0
      %291 = vmatpush2.msra.mxu0 0.0
      %292 = vmatprep.subr.mxu0 0.0
      %293 = vmatpush2.msra.mxu0 0.0
      %294 = vmatprep.subr.mxu0 0.0
      %295 = vmatpush2.msra.mxu0 0.0
      %296 = vmatprep.subr.mxu0 0.0
      %297 = vmatpush2.msra.mxu0 0.0
      %298 = vmatprep.mubr.f32.mxu0 0.0
      %299 = vmatmul.mubr.f32.gmra.mxu0 %v219
      %v300 = vpop.f32.mrf.mxu0
      %v301 = vadd.f32 %v216, %v300
      %v302 = vpop.f32.mrf.mxu0
      %303 = vmatprep.mubr.f32.mxu0 0.0
      %304 = vmatmul.mubr.f32.gmra.mxu0 %v222
      %v305 = vpop.f32.mrf.mxu0
      %v306 = vadd.f32 %v216, %v305
      %v307 = vpop.f32.mrf.mxu0
      %308 = vmatprep.mubr.f32.mxu0 0.0
      %309 = vmatmul.mubr.f32.gmra.mxu0 %v225
      %v310 = vpop.f32.mrf.mxu0
      %v311 = vadd.f32 %v216, %v310
      %v312 = vpop.f32.mrf.mxu0
      %313 = vmatprep.mubr.f32.mxu0 0.0
      %314 = vmatmul.mubr.f32.gmra.mxu0 %v228
      %v315 = vpop.f32.mrf.mxu0
      %v316 = vadd.f32 %v216, %v315
      %v317 = vpop.f32.mrf.mxu0
      %318 = vdwg.mxu0
      %v319 = vtanh.pop %v301
      %v320 = vtanh.pop %v306
      %v321 = vtanh.pop %v311
      %v322 = vtanh.pop %v316
      %v323 = vld [vmem:[%s2] sm:$0xff]
      %v324 = vld [vmem:[%s2 + $0x8] sm:$0xff]
      %v325 = vld [vmem:[%s2 + $0x10] sm:$0xff]
      %v326 = vld [vmem:[%s2 + $0x18] sm:$0xff]
      %v327 = vld [vmem:[%s2 + $0x20] sm:$0xff]
      %v328 = vld [vmem:[%s2 + $0x28] sm:$0xff]
      %v329 = vld [vmem:[%s2 + $0x30] sm:$0xff]
      %v330 = vld [vmem:[%s2 + $0x38] sm:$0xff]
      %v331 = vlaneseq
      %v332 = vshrl.u32 %v331, 7
      %v333 = vsub.s32 0, %v332
      %v334 = vrot.slane %v206, %v333
      %vm335 = vcmask 523264
      %v337 = vsel %vm335, %v319, 0
      %v340 = vsel %vm335, %v320, 0
      %v343 = vsel %vm335, %v321, 0
      %v346 = vsel %vm335, %v322, 0
      %348 = vmatprep.subr.mxu0 0.0
      %349 = vmatpush1.msra.mxu0 0.0
      %350 = vmatprep.subr.mxu0 0.0
      %351 = vmatpush1.msra.mxu0 0.0
      %352 = vmatprep.subr.mxu0 0.0
      %353 = vmatpush1.msra.mxu0 0.0
      %354 = vmatprep.subr.mxu0 0.0
      %355 = vmatpush1.msra.mxu0 0.0
      %356 = vmatprep.subr.mxu0 0.0
      %357 = vmatpush1.msra.mxu0 0.0
      %358 = vmatprep.subr.mxu0 0.0
      %359 = vmatpush1.msra.mxu0 0.0
      %360 = vmatprep.subr.mxu0 0.0
      %361 = vmatpush1.msra.mxu0 0.0
      %362 = vmatprep.subr.mxu0 0.0
      %363 = vmatpush1.msra.mxu0 0.0
      %364 = vmatprep.subr.mxu0 0.0
      %365 = vmatpush1.msra.mxu0 %v330
      %366 = vmatprep.subr.mxu0 0.0
      %367 = vmatpush1.msra.mxu0 %v329
      %368 = vmatprep.subr.mxu0 0.0
      %369 = vmatpush1.msra.mxu0 %v328
      %370 = vmatprep.subr.mxu0 0.0
      %371 = vmatpush1.msra.mxu0 %v327
      %372 = vmatprep.subr.mxu0 0.0
      %373 = vmatpush1.msra.mxu0 %v326
      %374 = vmatprep.subr.mxu0 0.0
      %375 = vmatpush1.msra.mxu0 %v325
      %376 = vmatprep.subr.mxu0 0.0
      %377 = vmatpush1.msra.mxu0 %v324
      %378 = vmatprep.subr.mxu0 0.0
      %379 = vmatpush1.msra.mxu0 %v323
      %380 = vmatprep.subr.mxu0 0.0
      %381 = vmatpush2.msra.mxu0 0.0
      %382 = vmatprep.subr.mxu0 0.0
      %383 = vmatpush2.msra.mxu0 0.0
      %384 = vmatprep.subr.mxu0 0.0
      %385 = vmatpush2.msra.mxu0 0.0
      %386 = vmatprep.subr.mxu0 0.0
      %387 = vmatpush2.msra.mxu0 0.0
      %388 = vmatprep.subr.mxu0 0.0
      %389 = vmatpush2.msra.mxu0 0.0
      %390 = vmatprep.subr.mxu0 0.0
      %391 = vmatpush2.msra.mxu0 0.0
      %392 = vmatprep.subr.mxu0 0.0
      %393 = vmatpush2.msra.mxu0 0.0
      %394 = vmatprep.subr.mxu0 0.0
      %395 = vmatpush2.msra.mxu0 0.0
      %396 = vmatprep.subr.mxu0 0.0
      %397 = vmatpush2.msra.mxu0 0.0
      %398 = vmatprep.subr.mxu0 0.0
      %399 = vmatpush2.msra.mxu0 0.0
      %400 = vmatprep.subr.mxu0 0.0
      %401 = vmatpush2.msra.mxu0 0.0
      %402 = vmatprep.subr.mxu0 0.0
      %403 = vmatpush2.msra.mxu0 0.0
      %404 = vmatprep.subr.mxu0 0.0
      %405 = vmatpush2.msra.mxu0 0.0
      %406 = vmatprep.subr.mxu0 0.0
      %407 = vmatpush2.msra.mxu0 0.0
      %408 = vmatprep.subr.mxu0 0.0
      %409 = vmatpush2.msra.mxu0 0.0
      %410 = vmatprep.subr.mxu0 0.0
      %411 = vmatpush2.msra.mxu0 0.0
      %412 = vmatprep.mubr.f32.mxu0 0.0
      %413 = vmatmul.mubr.f32.gmra.mxu0 %v337
      %v414 = vpop.f32.mrf.mxu0
      %v415 = vadd.f32 %v334, %v414
      %v416 = vpop.f32.mrf.mxu0
      %417 = vmatprep.mubr.f32.mxu0 0.0
      %418 = vmatmul.mubr.f32.gmra.mxu0 %v340
      %v419 = vpop.f32.mrf.mxu0
      %v420 = vadd.f32 %v334, %v419
      %v421 = vpop.f32.mrf.mxu0
      %422 = vmatprep.mubr.f32.mxu0 0.0
      %423 = vmatmul.mubr.f32.gmra.mxu0 %v343
      %v424 = vpop.f32.mrf.mxu0
      %v425 = vadd.f32 %v334, %v424
      %v426 = vpop.f32.mrf.mxu0
      %427 = vmatprep.mubr.f32.mxu0 0.0
      %428 = vmatmul.mubr.f32.gmra.mxu0 %v346
      %v429 = vpop.f32.mrf.mxu0
      %v430 = vadd.f32 %v334, %v429
      %v431 = vpop.f32.mrf.mxu0
      %432 = vdwg.mxu0
      %v433 = vtanh.pop %v415
      %v434 = vtanh.pop %v420
      %v435 = vtanh.pop %v425
      %v436 = vtanh.pop %v430
      %s437 = scalar_lea.vmem %s2, 64
      %v438 = vld [vmem:[%s437] sm:$0xff]
      %v439 = vld [vmem:[%s437 + $0x8] sm:$0xff]
      %v440 = vld [vmem:[%s437 + $0x10] sm:$0xff]
      %v441 = vld [vmem:[%s437 + $0x18] sm:$0xff]
      %v442 = vld [vmem:[%s437 + $0x20] sm:$0xff]
      %v443 = vld [vmem:[%s437 + $0x28] sm:$0xff]
      %v444 = vld [vmem:[%s437 + $0x30] sm:$0xff]
      %v445 = vld [vmem:[%s437 + $0x38] sm:$0xff]
      %v446 = vlaneseq
      %v447 = vshrl.u32 %v446, 7
      %v448 = vsub.s32 0, %v447
      %v449 = vrot.slane %v207, %v448
      %v451 = vsel %vm335, %v433, 0
      %v454 = vsel %vm335, %v434, 0
      %v457 = vsel %vm335, %v435, 0
      %v460 = vsel %vm335, %v436, 0
      %462 = vmatprep.subr.mxu0 0.0
      %463 = vmatpush1.msra.mxu0 0.0
      %464 = vmatprep.subr.mxu0 0.0
      %465 = vmatpush1.msra.mxu0 0.0
      %466 = vmatprep.subr.mxu0 0.0
      %467 = vmatpush1.msra.mxu0 0.0
      %468 = vmatprep.subr.mxu0 0.0
      %469 = vmatpush1.msra.mxu0 0.0
      %470 = vmatprep.subr.mxu0 0.0
      %471 = vmatpush1.msra.mxu0 0.0
      %472 = vmatprep.subr.mxu0 0.0
      %473 = vmatpush1.msra.mxu0 0.0
      %474 = vmatprep.subr.mxu0 0.0
      %475 = vmatpush1.msra.mxu0 0.0
      %476 = vmatprep.subr.mxu0 0.0
      %477 = vmatpush1.msra.mxu0 0.0
      %478 = vmatprep.subr.mxu0 0.0
      %479 = vmatpush1.msra.mxu0 %v445
      %480 = vmatprep.subr.mxu0 0.0
      %481 = vmatpush1.msra.mxu0 %v444
      %482 = vmatprep.subr.mxu0 0.0
      %483 = vmatpush1.msra.mxu0 %v443
      %484 = vmatprep.subr.mxu0 0.0
      %485 = vmatpush1.msra.mxu0 %v442
      %486 = vmatprep.subr.mxu0 0.0
      %487 = vmatpush1.msra.mxu0 %v441
      %488 = vmatprep.subr.mxu0 0.0
      %489 = vmatpush1.msra.mxu0 %v440
      %490 = vmatprep.subr.mxu0 0.0
      %491 = vmatpush1.msra.mxu0 %v439
      %492 = vmatprep.subr.mxu0 0.0
      %493 = vmatpush1.msra.mxu0 %v438
      %494 = vmatprep.subr.mxu0 0.0
      %495 = vmatpush2.msra.mxu0 0.0
      %496 = vmatprep.subr.mxu0 0.0
      %497 = vmatpush2.msra.mxu0 0.0
      %498 = vmatprep.subr.mxu0 0.0
      %499 = vmatpush2.msra.mxu0 0.0
      %500 = vmatprep.subr.mxu0 0.0
      %501 = vmatpush2.msra.mxu0 0.0
      %502 = vmatprep.subr.mxu0 0.0
      %503 = vmatpush2.msra.mxu0 0.0
      %504 = vmatprep.subr.mxu0 0.0
      %505 = vmatpush2.msra.mxu0 0.0
      %506 = vmatprep.subr.mxu0 0.0
      %507 = vmatpush2.msra.mxu0 0.0
      %508 = vmatprep.subr.mxu0 0.0
      %509 = vmatpush2.msra.mxu0 0.0
      %510 = vmatprep.subr.mxu0 0.0
      %511 = vmatpush2.msra.mxu0 0.0
      %512 = vmatprep.subr.mxu0 0.0
      %513 = vmatpush2.msra.mxu0 0.0
      %514 = vmatprep.subr.mxu0 0.0
      %515 = vmatpush2.msra.mxu0 0.0
      %516 = vmatprep.subr.mxu0 0.0
      %517 = vmatpush2.msra.mxu0 0.0
      %518 = vmatprep.subr.mxu0 0.0
      %519 = vmatpush2.msra.mxu0 0.0
      %520 = vmatprep.subr.mxu0 0.0
      %521 = vmatpush2.msra.mxu0 0.0
      %522 = vmatprep.subr.mxu0 0.0
      %523 = vmatpush2.msra.mxu0 0.0
      %524 = vmatprep.subr.mxu0 0.0
      %525 = vmatpush2.msra.mxu0 0.0
      %526 = vmatprep.mubr.f32.mxu0 0.0
      %527 = vmatmul.mubr.f32.gmra.mxu0 %v451
      %v528 = vpop.f32.mrf.mxu0
      %v529 = vadd.f32 %v449, %v528
      %v530 = vpop.f32.mrf.mxu0
      %531 = vmatprep.mubr.f32.mxu0 0.0
      %532 = vmatmul.mubr.f32.gmra.mxu0 %v454
      %v533 = vpop.f32.mrf.mxu0
      %v534 = vadd.f32 %v449, %v533
      %v535 = vpop.f32.mrf.mxu0
      %536 = vmatprep.mubr.f32.mxu0 0.0
      %537 = vmatmul.mubr.f32.gmra.mxu0 %v457
      %v538 = vpop.f32.mrf.mxu0
      %v539 = vadd.f32 %v449, %v538
      %v540 = vpop.f32.mrf.mxu0
      %541 = vmatprep.mubr.f32.mxu0 0.0
      %542 = vmatmul.mubr.f32.gmra.mxu0 %v460
      %v543 = vpop.f32.mrf.mxu0
      %v544 = vadd.f32 %v449, %v543
      %v545 = vpop.f32.mrf.mxu0
      %546 = vdwg.mxu0
      %v547 = vlaneseq
      %v548 = vand.u32 %v547, 127
      %vm549 = vcmp.lt.s32.totalorder %v548, 8
      %v550 = vsel %vm549, %v529, -1e+30
      %v551 = vsel %vm549, %v534, -1e+30
      %v552 = vsel %vm549, %v539, -1e+30
      %v553 = vsel %vm549, %v544, -1e+30
      %v554 = vsel %vm335, %v550, -inf
      %555 = vmax.xlane.f32.xlu0 %v554
      %v556 = vpop.xlane.xlu0 %555
      %v557 = vsel %vm335, %v551, -inf
      %558 = vmax.xlane.f32.xlu0 %v557
      %v559 = vpop.xlane.xlu0 %558
      %v560 = vsel %vm335, %v552, -inf
      %561 = vmax.xlane.f32.xlu0 %v560
      %v562 = vpop.xlane.xlu0 %561
      %v563 = vsel %vm335, %v553, -inf
      %564 = vmax.xlane.f32.xlu0 %v563
      %v565 = vpop.xlane.xlu0 %564
      %v566 = vsub.f32 %v550, %v556
      %v567 = vsub.f32 %v551, %v559
      %v568 = vsub.f32 %v552, %v562
      %v569 = vsub.f32 %v553, %v565
      %v570 = vmul.f32 %v566, 1.442695
      %v571 = vpow.pop %v570
      %v572 = vmul.f32 %v567, 1.442695
      %v573 = vpow.pop %v572
      %v574 = vmul.f32 %v568, 1.442695
      %v575 = vpow.pop %v574
      %v576 = vmul.f32 %v569, 1.442695
      %v577 = vpow.pop %v576
      %v578 = vsel %vm335, %v571, 0.0
      %579 = vadd.xlane.f32.xlu0 %v578
      %v580 = vpop.xlane.xlu0 %579
      %v581 = vsel %vm335, %v573, 0.0
      %582 = vadd.xlane.f32.xlu0 %v581
      %v583 = vpop.xlane.xlu0 %582
      %v584 = vsel %vm335, %v575, 0.0
      %585 = vadd.xlane.f32.xlu0 %v584
      %v586 = vpop.xlane.xlu0 %585
      %v587 = vsel %vm335, %v577, 0.0
      %588 = vadd.xlane.f32.xlu0 %v587
      %v589 = vpop.xlane.xlu0 %588
      %v590 = vlog2.pop %v580
      %v591 = vmul.f32 %v590, 0.6931472
      %v592 = vlog2.pop %v583
      %v593 = vmul.f32 %v592, 0.6931472
      %v594 = vlog2.pop %v586
      %v595 = vmul.f32 %v594, 0.6931472
      %v596 = vlog2.pop %v589
      %v597 = vmul.f32 %v596, 0.6931472
      %v598 = vcvt.f32.s32.to.zero.pseudo %v201
      %v599 = vcvt.f32.s32.to.zero.pseudo %v202
      %v600 = vcvt.f32.s32.to.zero.pseudo %v203
      %v601 = vcvt.f32.s32.to.zero.pseudo %v204
      %602 = vset.pattern.permute.xlu0 32
      %603 = vperm.xlu0 %602, %v598
      %v604 = vpop.permute.xlu0 %603
      %605 = vset.pattern.permute.xlu0 32
      %606 = vperm.xlu0 %605, %v599
      %v607 = vpop.permute.xlu0 %606
      %608 = vset.pattern.permute.xlu0 32
      %609 = vperm.xlu0 %608, %v600
      %v610 = vpop.permute.xlu0 %609
      %611 = vset.pattern.permute.xlu0 32
      %612 = vperm.xlu0 %611, %v601
      %v613 = vpop.permute.xlu0 %612
      %vm614 = vcmp.eq.s32.totalorder %v548, %v604
      %vm615 = vcmp.eq.s32.totalorder %v548, %v607
      %vm616 = vcmp.eq.s32.totalorder %v548, %v610
      %vm617 = vcmp.eq.s32.totalorder %v548, %v613
      %v618 = vsel %vm614, %v566, 0.0
      %v619 = vsel %vm615, %v567, 0.0
      %v620 = vsel %vm616, %v568, 0.0
      %v621 = vsel %vm617, %v569, 0.0
      %v622 = vsel %vm335, %v618, 0.0
      %623 = vadd.xlane.f32.xlu0 %v622
      %v624 = vpop.xlane.xlu0 %623
      %v625 = vsel %vm335, %v619, 0.0
      %626 = vadd.xlane.f32.xlu0 %v625
      %v627 = vpop.xlane.xlu0 %626
      %v628 = vsel %vm335, %v620, 0.0
      %629 = vadd.xlane.f32.xlu0 %v628
      %v630 = vpop.xlane.xlu0 %629
      %v631 = vsel %vm335, %v621, 0.0
      %632 = vadd.xlane.f32.xlu0 %v631
      %v633 = vpop.xlane.xlu0 %632
      %v634 = vsub.f32 %v624, %v591
      %v635 = vsub.f32 %v627, %v593
      %v636 = vsub.f32 %v630, %v595
      %v637 = vsub.f32 %v633, %v597
      %v638 = vmul.f32 %v571, %v566
      %v639 = vmul.f32 %v573, %v567
      %v640 = vmul.f32 %v575, %v568
      %v641 = vmul.f32 %v577, %v569
      %v642 = vsel %vm335, %v638, 0.0
      %643 = vadd.xlane.f32.xlu0 %v642
      %v644 = vpop.xlane.xlu0 %643
      %v645 = vsel %vm335, %v639, 0.0
      %646 = vadd.xlane.f32.xlu0 %v645
      %v647 = vpop.xlane.xlu0 %646
      %v648 = vsel %vm335, %v640, 0.0
      %649 = vadd.xlane.f32.xlu0 %v648
      %v650 = vpop.xlane.xlu0 %649
      %v651 = vsel %vm335, %v641, 0.0
      %652 = vadd.xlane.f32.xlu0 %v651
      %v653 = vpop.xlane.xlu0 %652
      %v654 = vrcp.pop %v580
      %v655 = vmul.f32 %v644, %v654
      %v656 = vrcp.pop %v583
      %v657 = vmul.f32 %v647, %v656
      %v658 = vrcp.pop %v586
      %v659 = vmul.f32 %v650, %v658
      %v660 = vrcp.pop %v589
      %v661 = vmul.f32 %v653, %v660
      %v662 = vsub.f32 %v591, %v655
      %v663 = vsub.f32 %v593, %v657
      %v664 = vsub.f32 %v595, %v659
      %v665 = vsub.f32 %v597, %v661
      %vm666 = vcmp.eq.s32.totalorder %v548, 8
      %v667 = vsel %vm666, %v529, 0.0
      %v668 = vsel %vm666, %v534, 0.0
      %v669 = vsel %vm666, %v539, 0.0
      %v670 = vsel %vm666, %v544, 0.0
      %v671 = vsel %vm335, %v667, 0.0
      %672 = vadd.xlane.f32.xlu0 %v671
      %v673 = vpop.xlane.xlu0 %672
      %v674 = vsel %vm335, %v668, 0.0
      %675 = vadd.xlane.f32.xlu0 %v674
      %v676 = vpop.xlane.xlu0 %675
      %v677 = vsel %vm335, %v669, 0.0
      %678 = vadd.xlane.f32.xlu0 %v677
      %v679 = vpop.xlane.xlu0 %678
      %v680 = vsel %vm335, %v670, 0.0
      %681 = vadd.xlane.f32.xlu0 %v680
      %v682 = vpop.xlane.xlu0 %681
      %vm683 = vcmp.eq.s32.totalorder %v548, 0
      %vm684 = vcmp.eq.s32.totalorder %v548, 1
      %vm685 = vcmp.eq.s32.totalorder %v548, 2
      %v686 = vsel %vm685, %v662, 0.0
      %v687 = vsel %vm685, %v663, 0.0
      %v688 = vsel %vm685, %v664, 0.0
      %v689 = vsel %vm685, %v665, 0.0
      %v690 = vsel %vm684, %v673, %v686
      %v691 = vsel %vm684, %v676, %v687
      %v692 = vsel %vm684, %v679, %v688
      %v693 = vsel %vm684, %v682, %v689
      %v694 = vsel %vm683, %v634, %v690
      %v695 = vsel %vm683, %v635, %v691
      %v696 = vsel %vm683, %v636, %v692
      %v697 = vsel %vm683, %v637, %v693
      %vm698 = vcmask 64512
      %699 = vst.msk [vmem:[%s199] sm:$0xff] %vm698, %v694
      %700 = vst.msk [vmem:[%s199 + $0x8] sm:$0xff] %vm698, %v695
      %701 = vst.msk [vmem:[%s199 + $0x10] sm:$0xff] %vm698, %v696
      %702 = vst.msk [vmem:[%s199 + $0x18] sm:$0xff] %vm698, %v697
      %s703 = smul.u32 4, %s15
      %p704 = scmp.lt.s32.totalorder %s703, 15
      %s705 = scalar_select %p704, %s703, 15
      %s706 = smul.addr %s705, 8
      %s707 = scalar_lea.vmem %s4, %s706
      // Predicated region
      $region37: #{actor_critic_evaluate.1} parent=35 // pred_check
        %p708 = pneg %p122
      $region38: #{actor_critic_evaluate.1} parent=35 // pred_check_branch
        %710 = sbr.rel (%p708) target = $region40
      $region39: #{actor_critic_evaluate.1} parent=35 // pred_region
        %s711 = smul.u32 4, %s15
      $region40: #{actor_critic_evaluate.1} parent=35 // pred_fallthru
        _
    $region36: #{actor_critic_evaluate.1} parent=5 // pred_fallthru
      _
    %p712 = scmp.le.s32.totalorder 2, %s10
    // Predicated region
    $region41: #{actor_critic_evaluate.1} parent=5 // pred_check
      %p713 = pneg %p712
    $region42: #{actor_critic_evaluate.1} parent=5 // pred_check_branch
      %715 = sbr.rel (%p713) target = $region44
    $region43: #{actor_critic_evaluate.1} parent=5 // pred_region
      %s716 = ssub.s32 %s10, 2
      // Predicated region
      $region45: #{actor_critic_evaluate.1} parent=43 // pred_check
        %p717 = pneg %p128
      $region46: #{actor_critic_evaluate.1} parent=43 // pred_check_branch
        %719 = sbr.rel (%p717) target = $region48
      $region47: #{actor_critic_evaluate.1} parent=43 // pred_region
        %s720 = smul.u32 4, %s16
        %p721 = scmp.lt.s32.totalorder %s720, 15
        %s722 = scalar_select %p721, %s720, 15
        %s723 = smul.addr %s722, 8
        %s724 = scalar_lea.vmem %s4, %s723
      $region48: #{actor_critic_evaluate.1} parent=43 // pred_fallthru
        _
    $region44: #{actor_critic_evaluate.1} parent=5 // pred_fallthru
      _
  $region6: #{actor_critic_evaluate.1} parent=0 // loop_footer
    %s14 = sadd.s32 1, %s10
  $region7: #{actor_critic_evaluate.1} parent=0 // loop_footer_branch
    %9 = sbr.rel target = $region3
  $region8: #{actor_critic_evaluate.1} parent=0 // loop_exit
    _

</llo_original>
